<compile_context>
chip_gen: v5e
topology: v5e:2x2
jax: 0.10.0
libtpu: 0.0.40
codegen_flags: <defaults>
</compile_context>

<pallas_src>
import jax
import jax.numpy as jnp
from jax.experimental import pallas as pl
from jax.experimental.pallas import tpu as pltpu

_EPS = 1e-10
_LANES = 128
_SUBLANES = 8


def _l2norm_kernel(x_ref, w_ref, o_ref):
    # x_ref / o_ref: (1, C, S, 128) VMEM blocks; w_ref: (C,) f32 in SMEM.
    x = x_ref[...].astype(jnp.float32)                 # (1, C, S, 128)
    # Channel reduction over a leading (non-tiled) axis -> plain VPU adds.
    sq_sum = jnp.sum(x * x, axis=1, keepdims=True)     # (1, 1, S, 128)
    norm = jnp.sqrt(sq_sum) + jnp.float32(_EPS)        # eps AFTER sqrt (PyTorch semantics)
    # One reciprocal per spatial location instead of C divides.
    # approx=False keeps the tight 1e-5 tolerance; flip to True if relaxed.
    inv = pl.reciprocal(norm, approx=False)            # (1, 1, S, 128)
    xn = x * inv                                       # (1, C, S, 128)
    num_ch = x_ref.shape[1]
    for c in range(num_ch):                            # unrolled; scalar weight from SMEM
        o_ref[0, c, :, :] = (xn[0, c, :, :] * w_ref[c]).astype(o_ref.dtype)


def l2norm(x_nchw, weight, *, block_bytes=2 << 20, interpret=False):
    """x_nchw: (N, C, H, W); weight: (C,). Returns (N, C, H, W)."""
    N, C, H, W = x_nchw.shape
    HW = H * W
    rows = pl.cdiv(HW, _LANES)
    itemsize = jnp.dtype(x_nchw.dtype).itemsize

    # Rows of 128 lanes per grid step, sized by a per-block VMEM byte budget.
    # (2 arrays x 2 pipeline buffers of `block_bytes` stays under scoped VMEM.)
    s_by_bytes = max(
        _SUBLANES,
        (block_bytes // (C * _LANES * itemsize)) // _SUBLANES * _SUBLANES,
    )
    if rows <= s_by_bytes:
        # Single spatial block: block dim == full array dim (no 8-alignment needed).
        s_tile = rows
        num_s = 1
    else:
        # Multiple blocks: tile is a multiple of 8 sublanes; a ragged last
        # block is masked by Pallas (OOB reads discarded, OOB writes dropped).
        s_tile = s_by_bytes
        num_s = pl.cdiv(rows, s_tile)

    HWp = rows * _LANES
    x3 = x_nchw.reshape(N, C, HW)
    if HWp != HW:
        # Zero padding is safe: padded lanes give sq_sum=0 -> out=0, sliced off below.
        x3 = jnp.pad(x3, ((0, 0), (0, 0), (0, HWp - HW)))
    x4 = x3.reshape(N, C, rows, _LANES)
    w = weight.astype(jnp.float32)

    out4 = pl.pallas_call(
        _l2norm_kernel,
        out_shape=jax.ShapeDtypeStruct((N, C, rows, _LANES), x_nchw.dtype),
        grid_spec=pltpu.PrefetchScalarGridSpec(
            num_scalar_prefetch=0,
            grid=(N, num_s),
            in_specs=[
                pl.BlockSpec((1, C, s_tile, _LANES), lambda n, s: (n, 0, s, 0)),
                pl.BlockSpec(memory_space=pltpu.MemorySpace.SMEM),
            ],
            out_specs=pl.BlockSpec((1, C, s_tile, _LANES), lambda n, s: (n, 0, s, 0)),
        ),
        compiler_params=pltpu.CompilerParams(
            dimension_semantics=("parallel", "parallel"),
        ),
        interpret=interpret,
    )(x4, w)

    out3 = out4.reshape(N, C, HWp)
    if HWp != HW:
        out3 = out3[:, :, :HW]
    return out3.reshape(N, C, H, W)


def l2norm_ref(x, weight, eps=_EPS):
    xf = x.astype(jnp.float32)
    norm = jnp.sqrt(jnp.sum(xf ** 2, axis=1, keepdims=True)) + eps
    out = weight[None, :, None, None].astype(jnp.float32) * xf / norm
    return out.astype(x.dtype)


if __name__ == "__main__":
    key = jax.random.PRNGKey(0)

    # Module config: n_channels=4, scale=20.0 (weight initialized to constant scale)
    n_channels = 4
    scale = 20.0
    N, C, H, W = 2, n_channels, 16, 16

    x = jax.random.normal(key, (N, C, H, W), dtype=jnp.float32)
    weight = jnp.full((C,), scale, dtype=jnp.float32)  # init.constant_(weight, gamma)

    out = jax.block_until_ready(l2norm(x, weight))
    ref = l2norm_ref(x, weight)

    assert out.shape == (N, C, H, W)
    assert jnp.allclose(out, ref, atol=1e-5, rtol=1e-5), "mismatch vs reference"

    print("KERNEL_OK")
</pallas_src>

<mosaic_0001>
module attributes {stable_mosaic.version = 11 : i64} {
  func.func @_l2norm_kernel(%arg0: i32, %arg1: i32, %arg2: memref<1x4x2x128xf32, #tpu.memory_space<vmem>>, %arg3: memref<4xf32, #tpu.memory_space<smem>>, %arg4: memref<1x4x2x128xf32, #tpu.memory_space<vmem>>) attributes {dimension_semantics = [#tpu.dimension_semantics<parallel>, #tpu.dimension_semantics<parallel>], iteration_bounds = array<i64: 2, 1>, scalar_prefetch = 0 : i64, scratch_operands = 0 : i64, tpu.core_type = #tpu.core_type<tc>, window_params = [{transform_indices = @transform_0, window_bounds = array<i64: 1, 4, 2, 128>}, {transform_indices = @transform_1, window_bounds = array<i64: 4>}, {transform_indices = @transform_2, window_bounds = array<i64: 1, 4, 2, 128>}]} {
    %c0 = arith.constant 0 : index
    %c0_0 = arith.constant 0 : index
    %c0_1 = arith.constant 0 : index
    %c0_2 = arith.constant 0 : index
    %0 = vector.load %arg2[%c0, %c0_0, %c0_1, %c0_2] : memref<1x4x2x128xf32, #tpu.memory_space<vmem>>, vector<1x4x2x128xf32>
    %1 = arith.mulf %0, %0 : vector<1x4x2x128xf32>
    %cst = arith.constant dense<0.000000e+00> : vector<1x2x128xf32>
    %2 = vector.multi_reduction <add>, %1, %cst [1] : vector<1x4x2x128xf32> to vector<1x2x128xf32>
    %3 = vector.shape_cast %2 : vector<1x2x128xf32> to vector<1x1x2x128xf32>
    %4 = math.sqrt %3 : vector<1x1x2x128xf32>
    %cst_3 = arith.constant 1.000000e-10 : f32
    %5 = vector.broadcast %cst_3 : f32 to vector<1x1x2x128xf32>
    %6 = arith.addf %4, %5 : vector<1x1x2x128xf32>
    %7 = tpu.reciprocal %6 : vector<1x1x2x128xf32> -> vector<1x1x2x128xf32>
    %8 = vector.broadcast %7 : vector<1x1x2x128xf32> to vector<1x4x2x128xf32>
    %9 = arith.mulf %0, %8 : vector<1x4x2x128xf32>
    %10 = vector.extract_strided_slice %9 {offsets = [0, 0, 0, 0], sizes = [1, 1, 2, 128], strides = [1, 1, 1, 1]} : vector<1x4x2x128xf32> to vector<1x1x2x128xf32>
    %11 = vector.shape_cast %10 : vector<1x1x2x128xf32> to vector<2x128xf32>
    %c0_4 = arith.constant 0 : index
    %12 = memref.load %arg3[%c0_4] : memref<4xf32, #tpu.memory_space<smem>>
    %13 = vector.broadcast %12 : f32 to vector<2x128xf32>
    %14 = arith.mulf %11, %13 : vector<2x128xf32>
    %c0_5 = arith.constant 0 : index
    %c0_6 = arith.constant 0 : index
    %c0_7 = arith.constant 0 : index
    %c0_8 = arith.constant 0 : index
    %15 = vector.load %arg4[%c0_5, %c0_6, %c0_7, %c0_8] : memref<1x4x2x128xf32, #tpu.memory_space<vmem>>, vector<1x1x2x128xf32>
    %16 = vector.shape_cast %15 : vector<1x1x2x128xf32> to vector<2x128xf32>
    %17 = vector.shape_cast %14 : vector<2x128xf32> to vector<1x1x2x128xf32>
    tpu.vector_store %arg4[%c0_5, %c0_6, %c0_7, %c0_8], %17 {strides = array<i32>} : memref<1x4x2x128xf32, #tpu.memory_space<vmem>>, vector<1x1x2x128xf32>,
    %18 = vector.extract_strided_slice %9 {offsets = [0, 1, 0, 0], sizes = [1, 1, 2, 128], strides = [1, 1, 1, 1]} : vector<1x4x2x128xf32> to vector<1x1x2x128xf32>
    %19 = vector.shape_cast %18 : vector<1x1x2x128xf32> to vector<2x128xf32>
    %c1 = arith.constant 1 : index
    %20 = memref.load %arg3[%c1] : memref<4xf32, #tpu.memory_space<smem>>
    %21 = vector.broadcast %20 : f32 to vector<2x128xf32>
    %22 = arith.mulf %19, %21 : vector<2x128xf32>
    %c0_9 = arith.constant 0 : index
    %c1_10 = arith.constant 1 : index
    %c0_11 = arith.constant 0 : index
    %c0_12 = arith.constant 0 : index
    %23 = vector.load %arg4[%c0_9, %c1_10, %c0_11, %c0_12] : memref<1x4x2x128xf32, #tpu.memory_space<vmem>>, vector<1x1x2x128xf32>
    %24 = vector.shape_cast %23 : vector<1x1x2x128xf32> to vector<2x128xf32>
    %25 = vector.shape_cast %22 : vector<2x128xf32> to vector<1x1x2x128xf32>
    tpu.vector_store %arg4[%c0_9, %c1_10, %c0_11, %c0_12], %25 {strides = array<i32>} : memref<1x4x2x128xf32, #tpu.memory_space<vmem>>, vector<1x1x2x128xf32>,
    %26 = vector.extract_strided_slice %9 {offsets = [0, 2, 0, 0], sizes = [1, 1, 2, 128], strides = [1, 1, 1, 1]} : vector<1x4x2x128xf32> to vector<1x1x2x128xf32>
    %27 = vector.shape_cast %26 : vector<1x1x2x128xf32> to vector<2x128xf32>
    %c2 = arith.constant 2 : index
    %28 = memref.load %arg3[%c2] : memref<4xf32, #tpu.memory_space<smem>>
    %29 = vector.broadcast %28 : f32 to vector<2x128xf32>
    %30 = arith.mulf %27, %29 : vector<2x128xf32>
    %c0_13 = arith.constant 0 : index
    %c2_14 = arith.constant 2 : index
    %c0_15 = arith.constant 0 : index
    %c0_16 = arith.constant 0 : index
    %31 = vector.load %arg4[%c0_13, %c2_14, %c0_15, %c0_16] : memref<1x4x2x128xf32, #tpu.memory_space<vmem>>, vector<1x1x2x128xf32>
    %32 = vector.shape_cast %31 : vector<1x1x2x128xf32> to vector<2x128xf32>
    %33 = vector.shape_cast %30 : vector<2x128xf32> to vector<1x1x2x128xf32>
    tpu.vector_store %arg4[%c0_13, %c2_14, %c0_15, %c0_16], %33 {strides = array<i32>} : memref<1x4x2x128xf32, #tpu.memory_space<vmem>>, vector<1x1x2x128xf32>,
    %34 = vector.extract_strided_slice %9 {offsets = [0, 3, 0, 0], sizes = [1, 1, 2, 128], strides = [1, 1, 1, 1]} : vector<1x4x2x128xf32> to vector<1x1x2x128xf32>
    %35 = vector.shape_cast %34 : vector<1x1x2x128xf32> to vector<2x128xf32>
    %c3 = arith.constant 3 : index
    %36 = memref.load %arg3[%c3] : memref<4xf32, #tpu.memory_space<smem>>
    %37 = vector.broadcast %36 : f32 to vector<2x128xf32>
    %38 = arith.mulf %35, %37 : vector<2x128xf32>
    %c0_17 = arith.constant 0 : index
    %c3_18 = arith.constant 3 : index
    %c0_19 = arith.constant 0 : index
    %c0_20 = arith.constant 0 : index
    %39 = vector.load %arg4[%c0_17, %c3_18, %c0_19, %c0_20] : memref<1x4x2x128xf32, #tpu.memory_space<vmem>>, vector<1x1x2x128xf32>
    %40 = vector.shape_cast %39 : vector<1x1x2x128xf32> to vector<2x128xf32>
    %41 = vector.shape_cast %38 : vector<2x128xf32> to vector<1x1x2x128xf32>
    tpu.vector_store %arg4[%c0_17, %c3_18, %c0_19, %c0_20], %41 {strides = array<i32>} : memref<1x4x2x128xf32, #tpu.memory_space<vmem>>, vector<1x1x2x128xf32>,
    return
  }
  func.func @transform_0(%arg0: i32, %arg1: i32) -> (i32, i32, i32, i32) {
    %c0_i32 = arith.constant 0 : i32
    %c0_i32_0 = arith.constant 0 : i32
    %c0_i32_1 = arith.constant 0 : i32
    return %arg0, %c0_i32, %arg1, %c0_i32_0 : i32, i32, i32, i32
  }
  func.func @transform_1(%arg0: i32, %arg1: i32) -> i32 {
    %c0_i32 = arith.constant 0 : i32
    %c0_i32_0 = arith.constant 0 : i32
    return %c0_i32 : i32
  }
  func.func @transform_2(%arg0: i32, %arg1: i32) -> (i32, i32, i32, i32) {
    %c0_i32 = arith.constant 0 : i32
    %c0_i32_0 = arith.constant 0 : i32
    %c0_i32_1 = arith.constant 0 : i32
    return %arg0, %c0_i32, %arg1, %c0_i32_0 : i32, i32, i32, i32
  }
}

</mosaic_0001>

<llo_original>
// kernel: tpu_custom_call.1
$region0: #{tpu_custom_call.1}
  #allocation0 [shape = 'u32[]', space=smem, size = 0x4, offset = 0x4, fixed_abs, tag = 'smem constant byte address 0x4 - core index']
  #allocation1 [shape = 'u32[72,128]{1,0:T(1,128)}', space=vmem, size = 0x9000, scoped, tag = 'internal scratch']
  %s0 = inlined_call_operand.hbm [shape: f32[2,4,2,128], index: 0, kind: input, shape index: {}]
  %s1 = inlined_call_operand.hbm [shape: f32[4], index: 1, kind: input, shape index: {}]
  %s2 = inlined_call_operand.hbm [shape: f32[2,4,2,128], index: 2, kind: output, shape index: {}]
  %s3 = sld [smem:[#allocation0]]
  $region49: #{tpu_custom_call.1} parent=0
    _
  %s5 = ssub.s32 1, %s3
  %s6 = scalar_select 0, %s5, %s3
  $region1: #{tpu_custom_call.1} parent=0
    #allocation2 [shape = 'u8[8192]{0}', space=vmem, size = 0x2000, scoped, tag = 'input window, operand 0']
    #allocation3 [shape = 's32[2]{0}', space=sflag, size = 0x8, scoped, tag = 'scoped memory for tpu_custom_call.1']
    #allocation4 [shape = 's32[2]{0}', space=sflag, size = 0x8, scoped, tag = 'scoped memory for tpu_custom_call.1']
    #allocation5 [shape = 's32[2]{0}', space=sflag, size = 0x8, scoped, tag = 'scoped memory for tpu_custom_call.1']
    #allocation6 [shape = 'u8[512]{0}', space=smem, size = 0x200, scoped, tag = 'input window, operand 1, single buffered']
    #allocation7 [shape = 'u8[8192]{0}', space=vmem, size = 0x2000, scoped, tag = 'output window, operand 0']
    %7 = vsyncpa [#allocation3], 0
    %s8 = scalar_lea.sflag [#allocation3], 1
    %9 = vsyncpa %s8, 0
    %10 = vsyncpa [#allocation5], 0
    %11 = vsyncpa [#allocation4], 0
    %s12 = scalar_lea.sflag [#allocation4], 1
    %13 = vsyncpa %s12, 0
    loop: start=0, step=1, limit=4
    $region2: #{tpu_custom_call.1} parent=1 // loop_pre_header
      _
    $region3: #{tpu_custom_call.1} parent=1 // loop_header
      %s15 = sphi 0, %s19
      %p16 = scmp.ge.s32.totalorder %s15, 4
      %s22 = sphi 0, %s34
      %s23 = sphi 0, %s30
      %s24 = sphi 0, %s22
      %s25 = sphi 0, %s23
      %s26 = sphi 0, %s24
      %s27 = sphi 0, %s25
      %s39 = sphi 0, %s41
      %s42 = sphi 0, %s39
      %s43 = sphi 0, %s42
      %s59 = sphi 0, %s43
      %s63 = sphi 0, %s63
      %s65 = sphi 0, %s63
      %s66 = sphi 0, %s65
      %s80 = sphi 0, %s66
      %s88 = sphi 0, %s90
      %s91 = sphi 0, %s88
      %s92 = sphi 0, %s91
      %s108 = sphi 0, %s92
    $region4: #{tpu_custom_call.1} parent=1 // loop_header_branch
      %18 = sbr.rel (%p16) target = $region8
    $region5: #{tpu_custom_call.1} parent=1 // loop_body
      %s20 = ssub.s32 %s15, 1
      %s21 = ssub.s32 %s15, 2
      %s28 = sadd.s32 1, %s23
      %p29 = scmp.ge.s32.totalorder %s28, 1
      %s30 = scalar_select %p29, 0, %s28
      %s31 = sadd.s32 1, %s22
      %s32 = scalar_select %p29, %s31, %s22
      %p33 = scmp.ge.s32.totalorder %s32, 2
      %s34 = scalar_select %p33, 0, %s32
      %s35 = ssub.s32 %s22, %s34
      %s36 = ssub.s32 %s23, %s30
      %s37 = sor.u32 %s35, %s36
      %p38 = scmp.eq.s32.totalorder %s37, 0
      %s40 = sadd.s32 %s39, 1
      %s41 = scalar_select %p38, %s39, %s40
      %p44 = pneg %p38
      %p45 = scmp.eq.s32.totalorder %s15, 1
      %p46 = por %p44, %p45
      %p47 = scmp.ne.s32.totalorder %s39, %s42
      %p48 = scmp.eq.s32.totalorder %s15, 0
      %p49 = por %p47, %p48
      %p50 = scmp.ne.s32.totalorder %s39, %s42
      %p51 = scmp.eq.s32.totalorder %s20, 1
      %p52 = por %p50, %p51
      %p53 = scmp.ne.s32.totalorder %s42, %s43
      %p54 = scmp.eq.s32.totalorder %s20, 0
      %p55 = por %p53, %p54
      %p56 = scmp.ne.s32.totalorder %s42, %s43
      %p57 = scmp.eq.s32.totalorder %s21, 1
      %p58 = por %p56, %p57
      %p60 = scmp.ne.s32.totalorder %s43, %s59
      %p61 = scmp.eq.s32.totalorder %s21, 0
      %p62 = por %p60, %p61
      %s64 = sadd.s32 %s63, 1
      %p67 = scmp.eq.s32.totalorder %s15, 1
      %p68 = scmp.ne.s32.totalorder %s63, %s65
      %p69 = scmp.eq.s32.totalorder %s15, 0
      %p70 = por %p68, %p69
      %p71 = scmp.ne.s32.totalorder %s63, %s65
      %p72 = scmp.eq.s32.totalorder %s20, 1
      %p73 = por %p71, %p72
      %p74 = scmp.ne.s32.totalorder %s65, %s66
      %p75 = scmp.eq.s32.totalorder %s20, 0
      %p76 = por %p74, %p75
      %p77 = scmp.ne.s32.totalorder %s65, %s66
      %p78 = scmp.eq.s32.totalorder %s21, 1
      %p79 = por %p77, %p78
      %p81 = scmp.ne.s32.totalorder %s66, %s80
      %p82 = scmp.eq.s32.totalorder %s21, 0
      %p83 = por %p81, %p82
      %s84 = ssub.s32 %s22, %s34
      %s85 = ssub.s32 %s23, %s30
      %s86 = sor.u32 %s84, %s85
      %p87 = scmp.eq.s32.totalorder %s86, 0
      %s89 = sadd.s32 %s88, 1
      %s90 = scalar_select %p87, %s88, %s89
      %p93 = pneg %p87
      %p94 = scmp.eq.s32.totalorder %s15, 1
      %p95 = por %p93, %p94
      %p96 = scmp.ne.s32.totalorder %s88, %s91
      %p97 = scmp.eq.s32.totalorder %s15, 0
      %p98 = por %p96, %p97
      %p99 = scmp.ne.s32.totalorder %s88, %s91
      %p100 = scmp.eq.s32.totalorder %s20, 1
      %p101 = por %p99, %p100
      %p102 = scmp.ne.s32.totalorder %s91, %s92
      %p103 = scmp.eq.s32.totalorder %s20, 0
      %p104 = por %p102, %p103
      %p105 = scmp.ne.s32.totalorder %s91, %s92
      %p106 = scmp.eq.s32.totalorder %s21, 1
      %p107 = por %p105, %p106
      %p109 = scmp.ne.s32.totalorder %s92, %s108
      %p110 = scmp.eq.s32.totalorder %s21, 0
      %p111 = por %p109, %p110
      %p112 = scmp.le.s32.totalorder 1, %s15
      %p113 = scmp.lt.s32.totalorder %s15, 3
      %p114 = pnand %p112, %p113
      %p115 = pneg %p114
      // Predicated region
      $region9: #{tpu_custom_call.1} parent=5 // pred_check
        _
      $region10: #{tpu_custom_call.1} parent=5 // pred_check_branch
        %117 = sbr.rel (%p114) target = $region12
      $region11: #{tpu_custom_call.1} parent=5 // pred_region
        %s118 = ssub.s32 %s15, 1
        // Predicated region
        $region13: #{tpu_custom_call.1} parent=11 // pred_check
          %p119 = pneg %p76
        $region14: #{tpu_custom_call.1} parent=11 // pred_check_branch
          %121 = sbr.rel (%p119) target = $region16
        $region15: #{tpu_custom_call.1} parent=11 // pred_region
          %123 = vsyncadd [#allocation5], 0
          %s125 = sshll.u32 %s1, 4
          %s126 = int_to_ptr.hbm [resolvable:$true] %s125
          %128 = dma.hbm_to_smem %s126, 16, [#allocation6], [#allocation5]
        $region16: #{tpu_custom_call.1} parent=11 // pred_fallthru
          _
      $region12: #{tpu_custom_call.1} parent=5 // pred_fallthru
        _
      %p129 = scmp.lt.s32.totalorder %s15, 2
      // Predicated region
      $region17: #{tpu_custom_call.1} parent=5 // pred_check
        %p130 = pneg %p129
      $region18: #{tpu_custom_call.1} parent=5 // pred_check_branch
        %132 = sbr.rel (%p130) target = $region20
      $region19: #{tpu_custom_call.1} parent=5 // pred_region
        // Predicated region
        $region21: #{tpu_custom_call.1} parent=19 // pred_check
          %p133 = pneg %p49
        $region22: #{tpu_custom_call.1} parent=19 // pred_check_branch
          %135 = sbr.rel (%p133) target = $region24
        $region23: #{tpu_custom_call.1} parent=19 // pred_region
          %s136 = sand.u32 %s39, 1
          %s137 = scalar_lea.sflag [#allocation3], %s136
          %s138 = sand.u32 %s39, 1
          %s139 = smul.addr %s138, 8
          %s140 = scalar_lea.vmem [#allocation2], %s139
          %142 = vsyncadd %s137, 0
          %s143 = smul.addr %s22, 4
          %s144 = sadd.s32 %s23, %s143
          %s145 = smul.addr %s144, 2
          %s146 = scalar_lea.hbm %s0, %s145
          %s147 = sshll.u32 %s146, 4
          %s148 = int_to_ptr.hbm [resolvable:$true] %s147
          %s149 = sshll.u32 %s140, 4
          %s150 = int_to_ptr.vmem [resolvable:$true] %s149
          %155 = dma.hbm_to_vmem [thread:$0]  %s148, 128, %s150, %s137, 32, 32, 2
        $region24: #{tpu_custom_call.1} parent=19 // pred_fallthru
          _
      $region20: #{tpu_custom_call.1} parent=5 // pred_fallthru
        _
      %p156 = scmp.le.s32.totalorder 1, %s15
      %p157 = scmp.lt.s32.totalorder %s15, 3
      %p158 = pnand %p156, %p157
      %p159 = pneg %p158
      // Predicated region
      $region25: #{tpu_custom_call.1} parent=5 // pred_check
        _
      $region26: #{tpu_custom_call.1} parent=5 // pred_check_branch
        %161 = sbr.rel (%p158) target = $region28
      $region27: #{tpu_custom_call.1} parent=5 // pred_region
        %s162 = ssub.s32 %s15, 1
        %s163 = sand.u32 %s42, 1
        %s164 = scalar_lea.sflag [#allocation3], %s163
        %s165 = sand.u32 %s42, 1
        %s166 = smul.addr %s165, 8
        %s167 = scalar_lea.vmem [#allocation2], %s166
        // Predicated region
        $region29: #{tpu_custom_call.1} parent=27 // pred_check
          %p168 = pneg %p55
        $region30: #{tpu_custom_call.1} parent=27 // pred_check_branch
          %170 = sbr.rel (%p168) target = $region32
        $region31: #{tpu_custom_call.1} parent=27 // pred_region
          %172 = dma.done %s164, 128
        $region32: #{tpu_custom_call.1} parent=27 // pred_fallthru
          _
        // Predicated region
        $region33: #{tpu_custom_call.1} parent=27 // pred_check
          %p173 = pneg %p76
        $region34: #{tpu_custom_call.1} parent=27 // pred_check_branch
          %175 = sbr.rel (%p173) target = $region36
        $region35: #{tpu_custom_call.1} parent=27 // pred_region
          %177 = dma.done [#allocation5], 16
        $region36: #{tpu_custom_call.1} parent=27 // pred_fallthru
          _
        %178 = sfence
        %s179 = sand.u32 %s42, 1
        %s180 = scalar_lea.sflag [#allocation3], %s179
        %s181 = sand.u32 %s42, 1
        %s182 = smul.addr %s181, 8
        %s183 = scalar_lea.vmem [#allocation2], %s182
        %p184 = pneg %p55
        %p185 = pneg %p52
        %p186 = pneg %p76
        %p187 = pneg %p73
        %p188 = pneg %p104
        %p189 = pneg %p101
        %s190 = sand.u32 %s91, 1
        %s191 = scalar_lea.sflag [#allocation4], %s190
        %s192 = sand.u32 %s91, 1
        %s193 = smul.addr %s192, 8
        %s194 = scalar_lea.vmem [#allocation7], %s193
        %v195 = vld [vmem:[%s167] sm:$0x3]
        %v196 = vld [vmem:[%s167 + $0x2] sm:$0x3]
        %v197 = vld [vmem:[%s167 + $0x4] sm:$0x3]
        %v198 = vld [vmem:[%s167 + $0x6] sm:$0x3]
        %v199 = vmul.f32 %v195, %v195
        %v200 = vmul.f32 %v196, %v196
        %v201 = vmul.f32 %v197, %v197
        %v202 = vmul.f32 %v198, %v198
        %vm203 = vcmask 1041408
        %v204 = vsel %vm203, %v199, 0.0
        %v205 = vsel %vm203, %v200, 0.0
        %v206 = vadd.f32 %v204, %v205
        %v207 = vsel %vm203, %v201, 0.0
        %v208 = vadd.f32 %v206, %v207
        %v209 = vsel %vm203, %v202, 0.0
        %v210 = vadd.f32 %v208, %v209
        %v211 = vrsqrt.pop %v210
        %v212 = vmul.f32 %v211, %v210
        %v213 = vmul.f32 %v212, %v211
        %v214 = vmul.f32 0.5, %v213
        %v215 = vsub.f32 1.5, %v214
        %v216 = vmul.f32 %v211, %v215
        %v217 = vmul.f32 %v210, %v216
        %vm218 = vcmp.eq.f32.partialorder %v210, inf
        %v219 = vsel %vm218, %v210, %v217
        %vm220 = vcmp.eq.f32.partialorder %v210, 0.0
        %v221 = vand.u32 %v210, 2147483648
        %v222 = vsel %vm220, %v221, %v219
        %v223 = vadd.f32 %v222, 1e-10
        %v224 = vrcp.pop %v223
        %v225 = vmul.f32 %v223, %v224
        %v226 = vsub.f32 1.0, %v225
        %v227 = vmul.f32 %v224, %v226
        %v228 = vadd.f32 %v224, %v227
        %vm229 = vweird.f32 %v223
        %vm230 = vweird.f32 %v224
        %vm231 = vmor %vm229, %vm230
        %v232 = vsel %vm231, %v224, %v228
        %v233 = vand.u32 2147483647, %v223
        %vm234 = vcmp.eq.f32.partialorder %v233, 8.507059e+37
        %v235 = vand.u32 %v223, 2147483648
        %v236 = vor.u32 1.1754944e-38, %v235
        %v237 = vsel %vm234, %v236, %v232
        %v238 = vmul.f32 %v195, %v237
        %v239 = vmul.f32 %v196, %v237
        %v240 = vmul.f32 %v197, %v237
        %v241 = vmul.f32 %v198, %v237
        %s242 = sld [smem:[#allocation6]]
        %v243 = vstv %s242
        %v244 = vmul.f32 %v238, %v243
        %245 = vst [vmem:[%s194] sm:$0x3] %v244
        %s246 = sld [smem:[#allocation6 + $0x1]]
        %v247 = vstv %s246
        %v248 = vmul.f32 %v239, %v247
        %s249 = scalar_lea.vmem %s194, 2 [#allocation7]
        %250 = vst [vmem:[%s249] sm:$0x3] %v248
        %s251 = sld [smem:[#allocation6 + $0x2]]
        %v252 = vstv %s251
        %v253 = vmul.f32 %v240, %v252
        %s254 = scalar_lea.vmem %s194, 4 [#allocation7]
        %255 = vst [vmem:[%s254] sm:$0x3] %v253
        %s256 = sld [smem:[#allocation6 + $0x3]]
        %v257 = vstv %s256
        %v258 = vmul.f32 %v241, %v257
        %s259 = scalar_lea.vmem %s194, 6 [#allocation7]
        %260 = vst [vmem:[%s259] sm:$0x3] %v258
        %s261 = sand.u32 %s91, 1
        %s262 = scalar_lea.sflag [#allocation4], %s261
        %s263 = sand.u32 %s91, 1
        %s264 = smul.addr %s263, 8
        %s265 = scalar_lea.vmem [#allocation7], %s264
        // Predicated region
        $region37: #{tpu_custom_call.1} parent=27 // pred_check
          %p266 = pneg %p101
        $region38: #{tpu_custom_call.1} parent=27 // pred_check_branch
          %268 = sbr.rel (%p266) target = $region40
        $region39: #{tpu_custom_call.1} parent=27 // pred_region
          %270 = vsyncadd %s262, 0
          %s271 = smul.addr %s24, 4
          %s272 = sadd.s32 %s25, %s271
          %s273 = smul.addr %s272, 2
          %s274 = scalar_lea.hbm %s2, %s273
          %s275 = sshll.u32 %s265, 4
          %s276 = int_to_ptr.vmem [resolvable:$true] %s275
          %s277 = sshll.u32 %s274, 4
          %s278 = int_to_ptr.hbm [resolvable:$true] %s277
          %283 = dma.vmem_to_hbm [thread:$0]  %s276, 128, %s278, %s262, 32, 32, 2
        $region40: #{tpu_custom_call.1} parent=27 // pred_fallthru
          _
      $region28: #{tpu_custom_call.1} parent=5 // pred_fallthru
        _
      %p284 = scmp.le.s32.totalorder 2, %s15
      // Predicated region
      $region41: #{tpu_custom_call.1} parent=5 // pred_check
        %p285 = pneg %p284
      $region42: #{tpu_custom_call.1} parent=5 // pred_check_branch
        %287 = sbr.rel (%p285) target = $region44
      $region43: #{tpu_custom_call.1} parent=5 // pred_region
        %s288 = ssub.s32 %s15, 2
        // Predicated region
        $region45: #{tpu_custom_call.1} parent=43 // pred_check
          %p289 = pneg %p107
        $region46: #{tpu_custom_call.1} parent=43 // pred_check_branch
          %291 = sbr.rel (%p289) target = $region48
        $region47: #{tpu_custom_call.1} parent=43 // pred_region
          %s292 = sand.u32 %s92, 1
          %s293 = scalar_lea.sflag [#allocation4], %s292
          %s294 = sand.u32 %s92, 1
          %s295 = smul.addr %s294, 8
          %s296 = scalar_lea.vmem [#allocation7], %s295
          %298 = dma.done %s293, 128
        $region48: #{tpu_custom_call.1} parent=43 // pred_fallthru
          _
      $region44: #{tpu_custom_call.1} parent=5 // pred_fallthru
        _
    $region6: #{tpu_custom_call.1} parent=1 // loop_footer
      %s19 = sadd.s32 1, %s15
    $region7: #{tpu_custom_call.1} parent=1 // loop_footer_branch
      %14 = sbr.rel target = $region3
    $region8: #{tpu_custom_call.1} parent=1 // loop_exit
      _
    %299 = vsyncpa [#allocation3], 1
    %s300 = scalar_lea.sflag [#allocation3], 1
    %301 = vsyncpa %s300, 1
    %302 = vsyncpa [#allocation4], 1
    %s303 = scalar_lea.sflag [#allocation4], 1
    %304 = vsyncpa %s303, 1
    %305 = vsyncpa [#allocation5], 1
    %s306 = scalar_lea.sflag [#allocation5], 1
    %307 = vsyncpa %s306, 1

</llo_original>
